<compile_context>
chip_gen: v7x
topology: tpu7x:2x2x1
jax: 0.10.0
libtpu: 0.0.40
codegen_flags: <defaults>
</compile_context>

<pallas_src>
import functools

import jax
import jax.numpy as jnp
from jax.experimental import pallas as pl
from jax.experimental.pallas import tpu as pltpu


def _round_up(v, m):
    return ((v + m - 1) // m) * m


# VMEM budget we plan tiles against: 32 MiB is the scoped default on v6e/v7x
# and safe on every generation (v7x physical VMEM is 64 MiB total).
_VMEM_LIMIT = 32 * 1024 * 1024


def _choose_node_tiling(num_nodes):
    """(n_pad, tm, tk): padded node count, row tile, reduction tile.

    The aggregation is HBM-bound on the N^2 A_hat stream, so the reduction
    tile tk grows toward 2048 (A tile = 512x2048 bf16 = 2 MiB, x2 buffers)
    while tm stays at 512 so the row grid keeps >= 2 entries (v7x megacore).
    Small graphs collapse to a single tile.
    """
    n128 = _round_up(max(num_nodes, 8), 128)
    if n128 <= 1024:
        return n128, n128, n128
    tm = 512
    n_pad = _round_up(n128, tm)
    tk = tm
    while tk * 2 <= 2048 and n_pad % (tk * 2) == 0:
        tk *= 2
    return n_pad, tm, tk


# ----------------------------------------------------------------------------
# Fused per-layer kernel:  out = A_hat @ (H @ W) + b   (+ optional ReLU)
# ----------------------------------------------------------------------------
def _gcn_layer_kernel(a_ref, h_ref, w_ref, b_ref, o_ref, acc_ref, *,
                      apply_relu, tk, h_resident):
    """grid = (row tiles i, reduction tiles k).

    f32 accumulator is initialized with the broadcast bias at k == 0 and the
    ReLU / downcast epilogue runs at the last k.
    """
    k = pl.program_id(1)

    @pl.when(k == 0)
    def _():
        acc_ref[...] = jnp.broadcast_to(b_ref[...], acc_ref.shape)

    if h_resident:
        start = pl.multiple_of(k * tk, tk)
        h_chunk = h_ref[pl.ds(start, tk), :]      # slice the resident H slab
    else:
        h_chunk = h_ref[...]                      # streamed (tk, cin) tile

    # Feature transform fused in: recomputed 2*tk*cin*cout flops per step hide
    # under the A-tile DMA (kernel is HBM-bound on every generation).
    xw = jnp.dot(h_chunk, w_ref[...],
                 preferred_element_type=jnp.float32).astype(jnp.bfloat16)
    acc_ref[...] += jnp.dot(a_ref[...], xw,
                            preferred_element_type=jnp.float32)

    @pl.when(k == pl.num_programs(1) - 1)
    def _():
        out = acc_ref[...]
        if apply_relu:
            out = jnp.maximum(out, 0.0)
        o_ref[...] = out.astype(o_ref.dtype)


def gcn_layer(a_p, h_p, w_p, b_p, *, tm, tk, apply_relu, out_dtype):
    n_pad = a_p.shape[0]
    cin_p = h_p.shape[1]
    cout_p = w_p.shape[1]

    budget = _VMEM_LIMIT - 6 * 1024 * 1024        # headroom for compiler scratch

    def footprint(tk_, resident):
        out_itemsize = jnp.dtype(out_dtype).itemsize
        return (2 * tm * tk_ * 2                                  # A, 2 bufs
                + (n_pad * cin_p * 2 if resident
                   else 2 * tk_ * cin_p * 2)                      # H
                + cin_p * cout_p * 2                              # W resident
                + 2 * tm * cout_p * out_itemsize                  # out, 2 bufs
                + tm * cout_p * 4)                                # f32 acc

    # Keep H fully VMEM-resident (fetched once) when it fits; otherwise stream
    # (tk, cin) tiles and shrink tk until the footprint fits the budget.
    h_resident = footprint(tk, True) <= budget
    if not h_resident:
        while tk > tm and footprint(tk, False) > budget:
            tk //= 2
        # TODO(synk): for very large in_features a dedicated cin-reduction grid
        # axis (or a separate XW pre-pass) would be needed; tk bottoms out at tm.

    if h_resident:
        h_spec = pl.BlockSpec((n_pad, cin_p), lambda i, k: (0, 0))
    else:
        h_spec = pl.BlockSpec((tk, cin_p), lambda i, k: (k, 0))

    kernel = functools.partial(_gcn_layer_kernel, apply_relu=apply_relu,
                               tk=tk, h_resident=h_resident)
    cost = pl.CostEstimate(
        flops=(2 * n_pad * n_pad * cout_p
               + 2 * n_pad * cin_p * cout_p * (n_pad // tm)),
        transcendentals=0,
        bytes_accessed=(n_pad * n_pad * 2          # A_hat (bf16) - dominant
                        + n_pad * cin_p * 2        # H (bf16)
                        + cin_p * cout_p * 2       # W (bf16)
                        + n_pad * cout_p * jnp.dtype(out_dtype).itemsize
                        + cout_p * 4))             # bias
    return pl.pallas_call(
        kernel,
        out_shape=jax.ShapeDtypeStruct((n_pad, cout_p), out_dtype),
        grid=(n_pad // tm, n_pad // tk),           # (row tiles, reduction)
        in_specs=[
            pl.BlockSpec((tm, tk), lambda i, k: (i, k)),        # A_hat tile
            h_spec,                                             # H
            pl.BlockSpec((cin_p, cout_p), lambda i, k: (0, 0)), # W (resident)
            pl.BlockSpec((1, cout_p), lambda i, k: (0, 0)),     # bias
        ],
        out_specs=pl.BlockSpec((tm, cout_p), lambda i, k: (i, 0)),
        scratch_shapes=[pltpu.VMEM((tm, cout_p), jnp.float32)],
        compiler_params=pltpu.CompilerParams(
            dimension_semantics=("parallel", "arbitrary"),
            vmem_limit_bytes=_VMEM_LIMIT),
        cost_estimate=cost,
    )(a_p, h_p, w_p, b_p)


# ----------------------------------------------------------------------------
# Glue: normalized adjacency (built padded, cast once), params, layer loop
# ----------------------------------------------------------------------------
def normalized_adjacency_padded(edge_index, num_nodes, n_pad,
                                dtype=jnp.bfloat16):
    """Dense D^{-1/2}(A + I)D^{-1/2} built at padded size; A[dst, src] = 1.

    Duplicate edges accumulate weight > 1 (matches PyG gcn_norm multiplicity
    semantics).  Padded rows/cols have zero degree and stay exactly zero.
    """
    src, dst = edge_index[0], edge_index[1]
    a = jnp.zeros((n_pad, n_pad), jnp.float32)
    a = a.at[dst, src].add(1.0)
    idx = jnp.arange(num_nodes)
    a = a.at[idx, idx].add(1.0)                      # self-loops on real nodes
    deg = a.sum(axis=1)
    dinv = jnp.where(deg > 0, jax.lax.rsqrt(deg), 0.0)
    return (dinv[:, None] * a * dinv[None, :]).astype(dtype)


def init_gcn_encoder_params(key, in_features, hidden_dims):
    """Glorot-uniform weights, zero bias (deterministic)."""
    dims = [in_features] + list(hidden_dims)
    params = []
    for i in range(len(dims) - 1):
        key, wk = jax.random.split(key)
        fan_in, fan_out = dims[i], dims[i + 1]
        limit = jnp.sqrt(6.0 / (fan_in + fan_out))
        w = jax.random.uniform(wk, (fan_in, fan_out), jnp.float32,
                               minval=-limit, maxval=limit)
        b = jnp.zeros((fan_out,), jnp.float32)
        params.append((w, b))
    return params


@jax.jit
def gcn_encoder_forward(params, x, edge_index):
    """Matches GCNEncoder.forward: ReLU after every layer except the last."""
    num_nodes, in_features = x.shape
    n_pad, tm, tk = _choose_node_tiling(num_nodes)

    # A_hat: padded build + bf16 cast in one fused expression; streamed by
    # every layer.
    # TODO(synk): int8 (v5e/v6e) / fp8-e4m3 (v7x) A_hat would halve the
    # dominant HBM stream; kept bf16 here to preserve f32-reference accuracy.
    a_p = normalized_adjacency_padded(edge_index, num_nodes, n_pad,
                                      dtype=jnp.bfloat16)

    # Activations stay padded and bf16 between layers; padded columns of A_hat
    # and padded rows of W are zero, so padding never leaks into real rows.
    cin0_p = _round_up(in_features, 128)
    h_p = jnp.pad(x, ((0, n_pad - num_nodes),
                      (0, cin0_p - in_features))).astype(jnp.bfloat16)

    n_layers = len(params)
    for li, (w, b) in enumerate(params):
        cin, cout = w.shape
        cin_p = _round_up(cin, 128)
        cout_p = _round_up(cout, 128)
        w_p = jnp.pad(w, ((0, cin_p - cin),
                          (0, cout_p - cout))).astype(jnp.bfloat16)
        b_p = jnp.pad(b, (0, cout_p - cout)).reshape(1, cout_p)
        is_last = li == n_layers - 1
        h_p = gcn_layer(a_p, h_p, w_p, b_p, tm=tm, tk=tk,
                        apply_relu=not is_last,
                        out_dtype=jnp.float32 if is_last else jnp.bfloat16)

    cout_last = params[-1][0].shape[1]
    return h_p[:num_nodes, :cout_last]               # slice once, at the end


# ----------------------------------------------------------------------------
# main
# ----------------------------------------------------------------------------
if __name__ == "__main__":
    key = jax.random.PRNGKey(0)

    num_nodes = 8
    in_features = 4
    hidden_dims = [32, 16]          # two GCNConv layers: 4 -> 32 -> 16
    num_edges = 20

    key, kx, ke, kp = jax.random.split(key, 4)
    x = jax.random.normal(kx, (num_nodes, in_features), jnp.float32)
    edge_index = jax.random.randint(ke, (2, num_edges), 0, num_nodes,
                                    dtype=jnp.int32)

    params = init_gcn_encoder_params(kp, in_features, hidden_dims)

    out = gcn_encoder_forward(params, x, edge_index)
    out = jax.block_until_ready(out)

    # Reference in plain JAX (f32); kernel streams A_hat / H / W in bf16 with
    # f32 accumulation, so use a correspondingly relaxed tolerance.
    a = jnp.zeros((num_nodes, num_nodes), jnp.float32)
    a = a.at[edge_index[1], edge_index[0]].add(1.0)
    a = a + jnp.eye(num_nodes, dtype=jnp.float32)
    deg = a.sum(axis=1)
    dinv = jnp.where(deg > 0, 1.0 / jnp.sqrt(deg), 0.0)
    a_hat = dinv[:, None] * a * dinv[None, :]
    h_ref = x
    for li, (w, b) in enumerate(params):
        h_ref = a_hat @ (h_ref @ w) + b
        if li < len(params) - 1:
            h_ref = jnp.maximum(h_ref, 0.0)

    assert out.shape == (num_nodes, hidden_dims[-1])
    assert jnp.allclose(out, h_ref, atol=5e-2, rtol=5e-2), (
        float(jnp.max(jnp.abs(out - h_ref))))

    print("KERNEL_OK")
</pallas_src>

<mosaic_0001>
module attributes {stable_mosaic.version = 11 : i64} {
  func.func @_gcn_layer_kernel(%arg0: i32, %arg1: i32, %arg2: memref<128x128xbf16, #tpu.memory_space<vmem>>, %arg3: memref<128x128xbf16, #tpu.memory_space<vmem>>, %arg4: memref<128x128xbf16, #tpu.memory_space<vmem>>, %arg5: memref<1x128xf32, #tpu.memory_space<vmem>>, %arg6: memref<128x128xbf16, #tpu.memory_space<vmem>>, %arg7: memref<128x128xf32, #tpu.memory_space<vmem>>) attributes {dimension_semantics = [#tpu.dimension_semantics<parallel>, #tpu.dimension_semantics<arbitrary>], iteration_bounds = array<i64: 1, 1>, scalar_prefetch = 0 : i64, scratch_operands = 1 : i64, tpu.core_type = #tpu.core_type<tc>, window_params = [{transform_indices = @transform_0, window_bounds = array<i64: 128, 128>}, {pipeline_mode = #tpu.pipeline_mode<synchronous>, transform_indices = @transform_1, window_bounds = array<i64: 128, 128>}, {pipeline_mode = #tpu.pipeline_mode<synchronous>, transform_indices = @transform_2, window_bounds = array<i64: 128, 128>}, {pipeline_mode = #tpu.pipeline_mode<synchronous>, transform_indices = @transform_3, window_bounds = array<i64: 1, 128>}, {transform_indices = @transform_4, window_bounds = array<i64: 128, 128>}]} {
    %c0_i32 = arith.constant 0 : i32
    %0 = arith.cmpi eq, %arg1, %c0_i32 : i32
    %1 = arith.extui %0 : i1 to i32
    %c0_i32_0 = arith.constant 0 : i32
    %2 = arith.cmpi ne, %1, %c0_i32_0 : i32
    scf.if %2 {
      %c0_12 = arith.constant 0 : index
      %c0_13 = arith.constant 0 : index
      %18 = vector.load %arg5[%c0_12, %c0_13] : memref<1x128xf32, #tpu.memory_space<vmem>>, vector<1x128xf32>
      %19 = vector.shape_cast %18 : vector<1x128xf32> to vector<1x128xf32>
      %20 = vector.broadcast %19 : vector<1x128xf32> to vector<128x128xf32>
      %c0_14 = arith.constant 0 : index
      %c0_15 = arith.constant 0 : index
      %21 = vector.load %arg7[%c0_14, %c0_15] : memref<128x128xf32, #tpu.memory_space<vmem>>, vector<128x128xf32>
      tpu.vector_store %arg7[%c0_14, %c0_15], %20 {strides = array<i32>} : memref<128x128xf32, #tpu.memory_space<vmem>>, vector<128x128xf32>,
    } else {
    }
    %c128_i32 = arith.constant 128 : i32
    %3 = arith.muli %arg1, %c128_i32 : i32
    %4 = tpu.assume_multiple %3, 128 : i32
    %5 = arith.index_cast %4 : i32 to index
    %c0 = arith.constant 0 : index
    %6 = vector.load %arg3[%5, %c0] : memref<128x128xbf16, #tpu.memory_space<vmem>>, vector<128x128xbf16>
    %c0_1 = arith.constant 0 : index
    %c0_2 = arith.constant 0 : index
    %7 = vector.load %arg4[%c0_1, %c0_2] : memref<128x128xbf16, #tpu.memory_space<vmem>>, vector<128x128xbf16>
    %cst = arith.constant dense<0.000000e+00> : vector<128x128xf32>
    %8 = tpu.matmul %6, %7, %cst {dimension_numbers = #tpu.dot_dimension_numbers<[1], [0], [0], [1], [0, 0, 1, 1], [], []>} : vector<128x128xbf16>, vector<128x128xbf16>, vector<128x128xf32> -> vector<128x128xf32>
    %9 = arith.truncf %8 : vector<128x128xf32> to vector<128x128xbf16>
    %c0_3 = arith.constant 0 : index
    %c0_4 = arith.constant 0 : index
    %10 = vector.load %arg7[%c0_3, %c0_4] : memref<128x128xf32, #tpu.memory_space<vmem>>, vector<128x128xf32>
    %c0_5 = arith.constant 0 : index
    %c0_6 = arith.constant 0 : index
    %11 = vector.load %arg2[%c0_5, %c0_6] : memref<128x128xbf16, #tpu.memory_space<vmem>>, vector<128x128xbf16>
    %cst_7 = arith.constant dense<0.000000e+00> : vector<128x128xf32>
    %12 = tpu.matmul %11, %9, %cst_7 {dimension_numbers = #tpu.dot_dimension_numbers<[1], [0], [0], [1], [0, 0, 1, 1], [], []>} : vector<128x128xbf16>, vector<128x128xbf16>, vector<128x128xf32> -> vector<128x128xf32>
    %13 = arith.addf %10, %12 : vector<128x128xf32>
    %c0_8 = arith.constant 0 : index
    %c0_9 = arith.constant 0 : index
    %14 = vector.load %arg7[%c0_8, %c0_9] : memref<128x128xf32, #tpu.memory_space<vmem>>, vector<128x128xf32>
    tpu.vector_store %arg7[%c0_8, %c0_9], %13 {strides = array<i32>} : memref<128x128xf32, #tpu.memory_space<vmem>>, vector<128x128xf32>,
    %c0_i32_10 = arith.constant 0 : i32
    %15 = arith.cmpi eq, %arg1, %c0_i32_10 : i32
    %16 = arith.extui %15 : i1 to i32
    %c0_i32_11 = arith.constant 0 : i32
    %17 = arith.cmpi ne, %16, %c0_i32_11 : i32
    scf.if %17 {
      %c0_12 = arith.constant 0 : index
      %c0_13 = arith.constant 0 : index
      %18 = vector.load %arg7[%c0_12, %c0_13] : memref<128x128xf32, #tpu.memory_space<vmem>>, vector<128x128xf32>
      %cst_14 = arith.constant 0.000000e+00 : f32
      %19 = vector.broadcast %cst_14 : f32 to vector<128x128xf32>
      %20 = arith.maximumf %18, %19 : vector<128x128xf32>
      %21 = arith.truncf %20 : vector<128x128xf32> to vector<128x128xbf16>
      %c0_15 = arith.constant 0 : index
      %c0_16 = arith.constant 0 : index
      %22 = vector.load %arg6[%c0_15, %c0_16] : memref<128x128xbf16, #tpu.memory_space<vmem>>, vector<128x128xbf16>
      tpu.vector_store %arg6[%c0_15, %c0_16], %21 {strides = array<i32>} : memref<128x128xbf16, #tpu.memory_space<vmem>>, vector<128x128xbf16>,
    } else {
    }
    return
  }
  func.func @transform_0(%arg0: i32, %arg1: i32) -> (i32, i32) {
    %c0_i32 = arith.constant 0 : i32
    return %arg0, %arg1 : i32, i32
  }
  func.func @transform_1(%arg0: i32, %arg1: i32) -> (i32, i32) {
    %c0_i32 = arith.constant 0 : i32
    %c0_i32_0 = arith.constant 0 : i32
    %c0_i32_1 = arith.constant 0 : i32
    return %c0_i32, %c0_i32_0 : i32, i32
  }
  func.func @transform_2(%arg0: i32, %arg1: i32) -> (i32, i32) {
    %c0_i32 = arith.constant 0 : i32
    %c0_i32_0 = arith.constant 0 : i32
    %c0_i32_1 = arith.constant 0 : i32
    return %c0_i32, %c0_i32_0 : i32, i32
  }
  func.func @transform_3(%arg0: i32, %arg1: i32) -> (i32, i32) {
    %c0_i32 = arith.constant 0 : i32
    %c0_i32_0 = arith.constant 0 : i32
    %c0_i32_1 = arith.constant 0 : i32
    return %c0_i32, %c0_i32_0 : i32, i32
  }
  func.func @transform_4(%arg0: i32, %arg1: i32) -> (i32, i32) {
    %c0_i32 = arith.constant 0 : i32
    %c0_i32_0 = arith.constant 0 : i32
    return %arg0, %c0_i32 : i32, i32
  }
}

module attributes {stable_mosaic.version = 11 : i64} {
  func.func @_gcn_layer_kernel(%arg0: i32, %arg1: i32, %arg2: memref<128x128xbf16, #tpu.memory_space<vmem>>, %arg3: memref<128x128xbf16, #tpu.memory_space<vmem>>, %arg4: memref<128x128xbf16, #tpu.memory_space<vmem>>, %arg5: memref<1x128xf32, #tpu.memory_space<vmem>>, %arg6: memref<128x128xf32, #tpu.memory_space<vmem>>, %arg7: memref<128x128xf32, #tpu.memory_space<vmem>>) attributes {dimension_semantics = [#tpu.dimension_semantics<parallel>, #tpu.dimension_semantics<arbitrary>], iteration_bounds = array<i64: 1, 1>, scalar_prefetch = 0 : i64, scratch_operands = 1 : i64, tpu.core_type = #tpu.core_type<tc>, window_params = [{transform_indices = @transform_0, window_bounds = array<i64: 128, 128>}, {pipeline_mode = #tpu.pipeline_mode<synchronous>, transform_indices = @transform_1, window_bounds = array<i64: 128, 128>}, {pipeline_mode = #tpu.pipeline_mode<synchronous>, transform_indices = @transform_2, window_bounds = array<i64: 128, 128>}, {pipeline_mode = #tpu.pipeline_mode<synchronous>, transform_indices = @transform_3, window_bounds = array<i64: 1, 128>}, {transform_indices = @transform_4, window_bounds = array<i64: 128, 128>}]} {
    %c0_i32 = arith.constant 0 : i32
    %0 = arith.cmpi eq, %arg1, %c0_i32 : i32
    %1 = arith.extui %0 : i1 to i32
    %c0_i32_0 = arith.constant 0 : i32
    %2 = arith.cmpi ne, %1, %c0_i32_0 : i32
    scf.if %2 {
      %c0_12 = arith.constant 0 : index
      %c0_13 = arith.constant 0 : index
      %18 = vector.load %arg5[%c0_12, %c0_13] : memref<1x128xf32, #tpu.memory_space<vmem>>, vector<1x128xf32>
      %19 = vector.shape_cast %18 : vector<1x128xf32> to vector<1x128xf32>
      %20 = vector.broadcast %19 : vector<1x128xf32> to vector<128x128xf32>
      %c0_14 = arith.constant 0 : index
      %c0_15 = arith.constant 0 : index
      %21 = vector.load %arg7[%c0_14, %c0_15] : memref<128x128xf32, #tpu.memory_space<vmem>>, vector<128x128xf32>
      tpu.vector_store %arg7[%c0_14, %c0_15], %20 {strides = array<i32>} : memref<128x128xf32, #tpu.memory_space<vmem>>, vector<128x128xf32>,
    } else {
    }
    %c128_i32 = arith.constant 128 : i32
    %3 = arith.muli %arg1, %c128_i32 : i32
    %4 = tpu.assume_multiple %3, 128 : i32
    %5 = arith.index_cast %4 : i32 to index
    %c0 = arith.constant 0 : index
    %6 = vector.load %arg3[%5, %c0] : memref<128x128xbf16, #tpu.memory_space<vmem>>, vector<128x128xbf16>
    %c0_1 = arith.constant 0 : index
    %c0_2 = arith.constant 0 : index
    %7 = vector.load %arg4[%c0_1, %c0_2] : memref<128x128xbf16, #tpu.memory_space<vmem>>, vector<128x128xbf16>
    %cst = arith.constant dense<0.000000e+00> : vector<128x128xf32>
    %8 = tpu.matmul %6, %7, %cst {dimension_numbers = #tpu.dot_dimension_numbers<[1], [0], [0], [1], [0, 0, 1, 1], [], []>} : vector<128x128xbf16>, vector<128x128xbf16>, vector<128x128xf32> -> vector<128x128xf32>
    %9 = arith.truncf %8 : vector<128x128xf32> to vector<128x128xbf16>
    %c0_3 = arith.constant 0 : index
    %c0_4 = arith.constant 0 : index
    %10 = vector.load %arg7[%c0_3, %c0_4] : memref<128x128xf32, #tpu.memory_space<vmem>>, vector<128x128xf32>
    %c0_5 = arith.constant 0 : index
    %c0_6 = arith.constant 0 : index
    %11 = vector.load %arg2[%c0_5, %c0_6] : memref<128x128xbf16, #tpu.memory_space<vmem>>, vector<128x128xbf16>
    %cst_7 = arith.constant dense<0.000000e+00> : vector<128x128xf32>
    %12 = tpu.matmul %11, %9, %cst_7 {dimension_numbers = #tpu.dot_dimension_numbers<[1], [0], [0], [1], [0, 0, 1, 1], [], []>} : vector<128x128xbf16>, vector<128x128xbf16>, vector<128x128xf32> -> vector<128x128xf32>
    %13 = arith.addf %10, %12 : vector<128x128xf32>
    %c0_8 = arith.constant 0 : index
    %c0_9 = arith.constant 0 : index
    %14 = vector.load %arg7[%c0_8, %c0_9] : memref<128x128xf32, #tpu.memory_space<vmem>>, vector<128x128xf32>
    tpu.vector_store %arg7[%c0_8, %c0_9], %13 {strides = array<i32>} : memref<128x128xf32, #tpu.memory_space<vmem>>, vector<128x128xf32>,
    %c0_i32_10 = arith.constant 0 : i32
    %15 = arith.cmpi eq, %arg1, %c0_i32_10 : i32
    %16 = arith.extui %15 : i1 to i32
    %c0_i32_11 = arith.constant 0 : i32
    %17 = arith.cmpi ne, %16, %c0_i32_11 : i32
    scf.if %17 {
      %c0_12 = arith.constant 0 : index
      %c0_13 = arith.constant 0 : index
      %18 = vector.load %arg7[%c0_12, %c0_13] : memref<128x128xf32, #tpu.memory_space<vmem>>, vector<128x128xf32>
      %c0_14 = arith.constant 0 : index
      %c0_15 = arith.constant 0 : index
      %19 = vector.load %arg6[%c0_14, %c0_15] : memref<128x128xf32, #tpu.memory_space<vmem>>, vector<128x128xf32>
      tpu.vector_store %arg6[%c0_14, %c0_15], %18 {strides = array<i32>} : memref<128x128xf32, #tpu.memory_space<vmem>>, vector<128x128xf32>,
    } else {
    }
    return
  }
  func.func @transform_0(%arg0: i32, %arg1: i32) -> (i32, i32) {
    %c0_i32 = arith.constant 0 : i32
    return %arg0, %arg1 : i32, i32
  }
  func.func @transform_1(%arg0: i32, %arg1: i32) -> (i32, i32) {
    %c0_i32 = arith.constant 0 : i32
    %c0_i32_0 = arith.constant 0 : i32
    %c0_i32_1 = arith.constant 0 : i32
    return %c0_i32, %c0_i32_0 : i32, i32
  }
  func.func @transform_2(%arg0: i32, %arg1: i32) -> (i32, i32) {
    %c0_i32 = arith.constant 0 : i32
    %c0_i32_0 = arith.constant 0 : i32
    %c0_i32_1 = arith.constant 0 : i32
    return %c0_i32, %c0_i32_0 : i32, i32
  }
  func.func @transform_3(%arg0: i32, %arg1: i32) -> (i32, i32) {
    %c0_i32 = arith.constant 0 : i32
    %c0_i32_0 = arith.constant 0 : i32
    %c0_i32_1 = arith.constant 0 : i32
    return %c0_i32, %c0_i32_0 : i32, i32
  }
  func.func @transform_4(%arg0: i32, %arg1: i32) -> (i32, i32) {
    %c0_i32 = arith.constant 0 : i32
    %c0_i32_0 = arith.constant 0 : i32
    return %arg0, %c0_i32 : i32, i32
  }
}

</mosaic_0001>

<llo_original>
// kernel: gcn_encoder_forward.3
$region0: #{gcn_encoder_forward.3}
  #allocation0 [shape = 'u32[]', space=smem, size = 0x4, offset = 0x4, fixed_abs, tag = 'smem constant byte address 0x4 - core index']
  #allocation1 [shape = 'u32[144,128]{1,0:T(1,128)}', space=vmem, size = 0x12000, scoped, tag = 'internal scratch']
  #allocation2 [shape = 'f32[128,128]{1,0:T(8,128)}', space=vmem, size = 0x10000, scoped, tag = 'scratch operand']
  %s0 = inlined_call_operand.vmem [shape: bf16[128,128], index: 0, kind: input, shape index: {}]
  %s1 = inlined_call_operand.vmem [shape: bf16[128,128], index: 1, kind: input, shape index: {}]
  %s2 = inlined_call_operand.vmem [shape: bf16[128,128], index: 2, kind: input, shape index: {}]
  %s3 = inlined_call_operand.vmem [shape: f32[1,128], index: 3, kind: input, shape index: {}]
  %s4 = inlined_call_operand.vmem [shape: f32[128,128], index: 4, kind: output, shape index: {}]
  %s5 = sld [smem:[#allocation0]]
  $region34: #{gcn_encoder_forward.3} parent=0
    _
  %s7 = ssub.s32 1, %s5
  %s8 = scalar_select 0, %s7, %s5
  // Predicated region
  $region2: #{gcn_encoder_forward.3} parent=0 // pred_check
    _
  $region3: #{gcn_encoder_forward.3} parent=0 // pred_check_branch
    %10 = sbr.rel (0) target = $region5
  $region4: #{gcn_encoder_forward.3} parent=0 // pred_region
    _
  $region5: #{gcn_encoder_forward.3} parent=0 // pred_fallthru
    _
  // Predicated region
  $region6: #{gcn_encoder_forward.3} parent=0 // pred_check
    _
  $region7: #{gcn_encoder_forward.3} parent=0 // pred_check_branch
    %12 = sbr.rel (0) target = $region9
  $region8: #{gcn_encoder_forward.3} parent=0 // pred_region
    _
  $region9: #{gcn_encoder_forward.3} parent=0 // pred_fallthru
    _
  // Predicated region
  $region10: #{gcn_encoder_forward.3} parent=0 // pred_check
    _
  $region11: #{gcn_encoder_forward.3} parent=0 // pred_check_branch
    %14 = sbr.rel (0) target = $region13
  $region12: #{gcn_encoder_forward.3} parent=0 // pred_region
    _
  $region13: #{gcn_encoder_forward.3} parent=0 // pred_fallthru
    _
  // Predicated region
  $region14: #{gcn_encoder_forward.3} parent=0 // pred_check
    _
  $region15: #{gcn_encoder_forward.3} parent=0 // pred_check_branch
    %16 = sbr.rel (0) target = $region17
  $region16: #{gcn_encoder_forward.3} parent=0 // pred_region
    _
  $region17: #{gcn_encoder_forward.3} parent=0 // pred_fallthru
    _
  %p18 = scmp.eq.s32.totalorder 0, 0
  // Predicated region
  $region18: #{gcn_encoder_forward.3} parent=0 // pred_check
    %p19 = pneg %p18
  $region19: #{gcn_encoder_forward.3} parent=0 // pred_check_branch
    %21 = sbr.rel (%p19) target = $region21
  $region20: #{gcn_encoder_forward.3} parent=0 // pred_region
    %v22 = vld [vmem:[%s3] sm:$0x1]
    %v24 = vlaneseq
    %v25 = vshrl.u32 %v24, 7
    %v26 = vsub.s32 0, %v25
    %v27 = vrot.slane %v22, %v26
    %29 = vst [vmem:[#allocation2] sm:$0xff] %v27
    %30 = vst [vmem:[#allocation2 + $0x8] sm:$0xff] %v27
    %31 = vst [vmem:[#allocation2 + $0x10] sm:$0xff] %v27
    %32 = vst [vmem:[#allocation2 + $0x18] sm:$0xff] %v27
    %33 = vst [vmem:[#allocation2 + $0x20] sm:$0xff] %v27
    %34 = vst [vmem:[#allocation2 + $0x28] sm:$0xff] %v27
    %35 = vst [vmem:[#allocation2 + $0x30] sm:$0xff] %v27
    %36 = vst [vmem:[#allocation2 + $0x38] sm:$0xff] %v27
    %37 = vst [vmem:[#allocation2 + $0x40] sm:$0xff] %v27
    %38 = vst [vmem:[#allocation2 + $0x48] sm:$0xff] %v27
    %39 = vst [vmem:[#allocation2 + $0x50] sm:$0xff] %v27
    %40 = vst [vmem:[#allocation2 + $0x58] sm:$0xff] %v27
    %41 = vst [vmem:[#allocation2 + $0x60] sm:$0xff] %v27
    %42 = vst [vmem:[#allocation2 + $0x68] sm:$0xff] %v27
    %43 = vst [vmem:[#allocation2 + $0x70] sm:$0xff] %v27
    %44 = vst [vmem:[#allocation2 + $0x78] sm:$0xff] %v27
  $region21: #{gcn_encoder_forward.3} parent=0 // pred_fallthru
    _
  %s45 = smul.u32 0, 128
  %s46 = sshra.s32 %s45, 3
  %s47 = sand.u32 %s45, 7
  %s48 = smul.addr %s46, 4
  %s49 = scalar_lea.vmem %s1, %s48
  %v50 = vld [vmem:[%s49] sm:$0xf]
  %v51 = vld [vmem:[%s49 + $0x4] sm:$0xf]
  %v52 = vld [vmem:[%s49 + $0x8] sm:$0xf]
  %v53 = vld [vmem:[%s49 + $0xc] sm:$0xf]
  %v54 = vld [vmem:[%s49 + $0x10] sm:$0xf]
  %v55 = vld [vmem:[%s49 + $0x14] sm:$0xf]
  %v56 = vld [vmem:[%s49 + $0x18] sm:$0xf]
  %v57 = vld [vmem:[%s49 + $0x1c] sm:$0xf]
  %v58 = vld [vmem:[%s49 + $0x20] sm:$0xf]
  %v59 = vld [vmem:[%s49 + $0x24] sm:$0xf]
  %v60 = vld [vmem:[%s49 + $0x28] sm:$0xf]
  %v61 = vld [vmem:[%s49 + $0x2c] sm:$0xf]
  %v62 = vld [vmem:[%s49 + $0x30] sm:$0xf]
  %v63 = vld [vmem:[%s49 + $0x34] sm:$0xf]
  %v64 = vld [vmem:[%s49 + $0x38] sm:$0xf]
  %v65 = vld [vmem:[%s49 + $0x3c] sm:$0xf]
  %v66 = vld [vmem:[%s2] sm:$0xf]
  %v67 = vld [vmem:[%s2 + $0x4] sm:$0xf]
  %v68 = vld [vmem:[%s2 + $0x8] sm:$0xf]
  %v69 = vld [vmem:[%s2 + $0xc] sm:$0xf]
  %v70 = vld [vmem:[%s2 + $0x10] sm:$0xf]
  %v71 = vld [vmem:[%s2 + $0x14] sm:$0xf]
  %v72 = vld [vmem:[%s2 + $0x18] sm:$0xf]
  %v73 = vld [vmem:[%s2 + $0x1c] sm:$0xf]
  %v74 = vld [vmem:[%s2 + $0x20] sm:$0xf]
  %v75 = vld [vmem:[%s2 + $0x24] sm:$0xf]
  %v76 = vld [vmem:[%s2 + $0x28] sm:$0xf]
  %v77 = vld [vmem:[%s2 + $0x2c] sm:$0xf]
  %v78 = vld [vmem:[%s2 + $0x30] sm:$0xf]
  %v79 = vld [vmem:[%s2 + $0x34] sm:$0xf]
  %v80 = vld [vmem:[%s2 + $0x38] sm:$0xf]
  %v81 = vld [vmem:[%s2 + $0x3c] sm:$0xf]
  %v98 = vunpack.c.l.b16 %v50
  %v99 = vunpack.c.l.b16 %v51
  %v100 = vunpack.c.l.b16 %v52
  %v101 = vunpack.c.l.b16 %v53
  %v102 = vunpack.c.l.b16 %v54
  %v103 = vunpack.c.l.b16 %v55
  %v104 = vunpack.c.l.b16 %v56
  %v105 = vunpack.c.l.b16 %v57
  %v106 = vunpack.c.l.b16 %v58
  %v107 = vunpack.c.l.b16 %v59
  %v108 = vunpack.c.l.b16 %v60
  %v109 = vunpack.c.l.b16 %v61
  %v110 = vunpack.c.l.b16 %v62
  %v111 = vunpack.c.l.b16 %v63
  %v112 = vunpack.c.l.b16 %v64
  %v113 = vunpack.c.l.b16 %v65
  %v114 = vpack.c.b16 %v99, %v98
  %v115 = vpack.c.b16 %v101, %v100
  %v116 = vpack.c.b16 %v103, %v102
  %v117 = vpack.c.b16 %v105, %v104
  %v118 = vpack.c.b16 %v107, %v106
  %v119 = vpack.c.b16 %v109, %v108
  %v120 = vpack.c.b16 %v111, %v110
  %v121 = vpack.c.b16 %v113, %v112
  %v146 = vunpack.c.l.b16 %v66
  %v147 = vunpack.c.l.b16 %v67
  %v148 = vunpack.c.l.b16 %v68
  %v149 = vunpack.c.l.b16 %v69
  %v150 = vunpack.c.l.b16 %v70
  %v151 = vunpack.c.l.b16 %v71
  %v152 = vunpack.c.l.b16 %v72
  %v153 = vunpack.c.l.b16 %v73
  %v154 = vunpack.c.l.b16 %v74
  %v155 = vunpack.c.l.b16 %v75
  %v156 = vunpack.c.l.b16 %v76
  %v157 = vunpack.c.l.b16 %v77
  %v158 = vunpack.c.l.b16 %v78
  %v159 = vunpack.c.l.b16 %v79
  %v160 = vunpack.c.l.b16 %v80
  %v161 = vunpack.c.l.b16 %v81
  %v162 = vpack.c.b16 %v147, %v146
  %v163 = vpack.c.b16 %v149, %v148
  %v164 = vpack.c.b16 %v151, %v150
  %v165 = vpack.c.b16 %v153, %v152
  %v166 = vpack.c.b16 %v155, %v154
  %v167 = vpack.c.b16 %v157, %v156
  %v168 = vpack.c.b16 %v159, %v158
  %v169 = vpack.c.b16 %v161, %v160
  %178 = vmatprep.subr.bf16.mxu0 0
  %179 = vmatpush1.bf16.msra.mxu0 %v162
  %180 = vmatprep.subr.bf16.mxu0 0
  %181 = vmatpush1.bf16.msra.mxu0 %v163
  %182 = vmatprep.subr.bf16.mxu0 0
  %183 = vmatpush1.bf16.msra.mxu0 %v164
  %184 = vmatprep.subr.bf16.mxu0 0
  %185 = vmatpush1.bf16.msra.mxu0 %v165
  %186 = vmatprep.subr.bf16.mxu0 0
  %187 = vmatpush1.bf16.msra.mxu0 %v166
  %188 = vmatprep.subr.bf16.mxu0 0
  %189 = vmatpush1.bf16.msra.mxu0 %v167
  %190 = vmatprep.subr.bf16.mxu0 0
  %191 = vmatpush1.bf16.msra.mxu0 %v168
  %192 = vmatprep.subr.bf16.mxu0 0
  %193 = vmatpush1.bf16.msra.mxu0 %v169
  %194 = vmatprep.subr.bf16.mxu0 0
  %195 = vmatpush1.bf16.msra.mxu0 0
  %196 = vmatprep.subr.bf16.mxu0 0
  %197 = vmatpush1.bf16.msra.mxu0 0
  %198 = vmatprep.subr.bf16.mxu0 0
  %199 = vmatpush1.bf16.msra.mxu0 0
  %200 = vmatprep.subr.bf16.mxu0 0
  %201 = vmatpush1.bf16.msra.mxu0 0
  %202 = vmatprep.subr.bf16.mxu0 0
  %203 = vmatpush1.bf16.msra.mxu0 0
  %204 = vmatprep.subr.bf16.mxu0 0
  %205 = vmatpush1.bf16.msra.mxu0 0
  %206 = vmatprep.subr.bf16.mxu0 0
  %207 = vmatpush1.bf16.msra.mxu0 0
  %208 = vmatprep.subr.bf16.mxu0 0
  %209 = vmatpush1.bf16.msra.mxu0 0
  %210 = vmatprep.mubr.bf16.mxu0 0
  %211 = vmatmul.mubr.bf16.gmra.mrb[0].mxu0 %v114
  %v212 = vpop.f32.mrb[0].mxu0
  %v213 = vadd.f32 0.0, %v212
  %v214 = vpop.f32.mrb[0].mxu0
  %v215 = vpop.f32.mrb[0].mxu0
  %v216 = vadd.f32 0.0, %v215
  %v217 = vpop.f32.mrb[0].mxu0
  %218 = vmatprep.mubr.bf16.mxu0 0
  %219 = vmatmul.mubr.bf16.gmra.mrb[0].mxu0 %v115
  %v220 = vpop.f32.mrb[0].mxu0
  %v221 = vadd.f32 0.0, %v220
  %v222 = vpop.f32.mrb[0].mxu0
  %v223 = vpop.f32.mrb[0].mxu0
  %v224 = vadd.f32 0.0, %v223
  %v225 = vpop.f32.mrb[0].mxu0
  %226 = vmatprep.mubr.bf16.mxu0 0
  %227 = vmatmul.mubr.bf16.gmra.mrb[0].mxu0 %v116
  %v228 = vpop.f32.mrb[0].mxu0
  %v229 = vadd.f32 0.0, %v228
  %v230 = vpop.f32.mrb[0].mxu0
  %v231 = vpop.f32.mrb[0].mxu0
  %v232 = vadd.f32 0.0, %v231
  %v233 = vpop.f32.mrb[0].mxu0
  %234 = vmatprep.mubr.bf16.mxu0 0
  %235 = vmatmul.mubr.bf16.gmra.mrb[0].mxu0 %v117
  %v236 = vpop.f32.mrb[0].mxu0
  %v237 = vadd.f32 0.0, %v236
  %v238 = vpop.f32.mrb[0].mxu0
  %v239 = vpop.f32.mrb[0].mxu0
  %v240 = vadd.f32 0.0, %v239
  %v241 = vpop.f32.mrb[0].mxu0
  %242 = vmatprep.mubr.bf16.mxu0 0
  %243 = vmatmul.mubr.bf16.gmra.mrb[0].mxu0 %v118
  %v244 = vpop.f32.mrb[0].mxu0
  %v245 = vadd.f32 0.0, %v244
  %v246 = vpop.f32.mrb[0].mxu0
  %v247 = vpop.f32.mrb[0].mxu0
  %v248 = vadd.f32 0.0, %v247
  %v249 = vpop.f32.mrb[0].mxu0
  %250 = vmatprep.mubr.bf16.mxu0 0
  %251 = vmatmul.mubr.bf16.gmra.mrb[0].mxu0 %v119
  %v252 = vpop.f32.mrb[0].mxu0
  %v253 = vadd.f32 0.0, %v252
  %v254 = vpop.f32.mrb[0].mxu0
  %v255 = vpop.f32.mrb[0].mxu0
  %v256 = vadd.f32 0.0, %v255
  %v257 = vpop.f32.mrb[0].mxu0
  %258 = vmatprep.mubr.bf16.mxu0 0
  %259 = vmatmul.mubr.bf16.gmra.mrb[0].mxu0 %v120
  %v260 = vpop.f32.mrb[0].mxu0
  %v261 = vadd.f32 0.0, %v260
  %v262 = vpop.f32.mrb[0].mxu0
  %v263 = vpop.f32.mrb[0].mxu0
  %v264 = vadd.f32 0.0, %v263
  %v265 = vpop.f32.mrb[0].mxu0
  %266 = vmatprep.mubr.bf16.mxu0 0
  %267 = vmatmul.mubr.bf16.gmra.mrb[0].mxu0 %v121
  %v268 = vpop.f32.mrb[0].mxu0
  %v269 = vadd.f32 0.0, %v268
  %v270 = vpop.f32.mrb[0].mxu0
  %v271 = vpop.f32.mrb[0].mxu0
  %v272 = vadd.f32 0.0, %v271
  %v273 = vpop.f32.mrb[0].mxu0
  %274 = vdwg.mxu0
  %v275 = vpack.c.bf16 %v216, %v213
  %v276 = vpack.c.bf16 %v224, %v221
  %v277 = vpack.c.bf16 %v232, %v229
  %v278 = vpack.c.bf16 %v240, %v237
  %v279 = vpack.c.bf16 %v248, %v245
  %v280 = vpack.c.bf16 %v256, %v253
  %v281 = vpack.c.bf16 %v264, %v261
  %v282 = vpack.c.bf16 %v272, %v269
  %v283 = vld [vmem:[#allocation2] sm:$0xff]
  %v284 = vld [vmem:[#allocation2 + $0x8] sm:$0xff]
  %v285 = vld [vmem:[#allocation2 + $0x10] sm:$0xff]
  %v286 = vld [vmem:[#allocation2 + $0x18] sm:$0xff]
  %v287 = vld [vmem:[#allocation2 + $0x20] sm:$0xff]
  %v288 = vld [vmem:[#allocation2 + $0x28] sm:$0xff]
  %v289 = vld [vmem:[#allocation2 + $0x30] sm:$0xff]
  %v290 = vld [vmem:[#allocation2 + $0x38] sm:$0xff]
  %v291 = vld [vmem:[#allocation2 + $0x40] sm:$0xff]
  %v292 = vld [vmem:[#allocation2 + $0x48] sm:$0xff]
  %v293 = vld [vmem:[#allocation2 + $0x50] sm:$0xff]
  %v294 = vld [vmem:[#allocation2 + $0x58] sm:$0xff]
  %v295 = vld [vmem:[#allocation2 + $0x60] sm:$0xff]
  %v296 = vld [vmem:[#allocation2 + $0x68] sm:$0xff]
  %v297 = vld [vmem:[#allocation2 + $0x70] sm:$0xff]
  %v298 = vld [vmem:[#allocation2 + $0x78] sm:$0xff]
  %v299 = vld [vmem:[%s0] sm:$0xf]
  %v300 = vld [vmem:[%s0 + $0x4] sm:$0xf]
  %v301 = vld [vmem:[%s0 + $0x8] sm:$0xf]
  %v302 = vld [vmem:[%s0 + $0xc] sm:$0xf]
  %v303 = vld [vmem:[%s0 + $0x10] sm:$0xf]
  %v304 = vld [vmem:[%s0 + $0x14] sm:$0xf]
  %v305 = vld [vmem:[%s0 + $0x18] sm:$0xf]
  %v306 = vld [vmem:[%s0 + $0x1c] sm:$0xf]
  %v307 = vld [vmem:[%s0 + $0x20] sm:$0xf]
  %v308 = vld [vmem:[%s0 + $0x24] sm:$0xf]
  %v309 = vld [vmem:[%s0 + $0x28] sm:$0xf]
  %v310 = vld [vmem:[%s0 + $0x2c] sm:$0xf]
  %v311 = vld [vmem:[%s0 + $0x30] sm:$0xf]
  %v312 = vld [vmem:[%s0 + $0x34] sm:$0xf]
  %v313 = vld [vmem:[%s0 + $0x38] sm:$0xf]
  %v314 = vld [vmem:[%s0 + $0x3c] sm:$0xf]
  %v331 = vunpack.c.l.b16 %v299
  %v332 = vunpack.c.l.b16 %v300
  %v333 = vunpack.c.l.b16 %v301
  %v334 = vunpack.c.l.b16 %v302
  %v335 = vunpack.c.l.b16 %v303
  %v336 = vunpack.c.l.b16 %v304
  %v337 = vunpack.c.l.b16 %v305
  %v338 = vunpack.c.l.b16 %v306
  %v339 = vunpack.c.l.b16 %v307
  %v340 = vunpack.c.l.b16 %v308
  %v341 = vunpack.c.l.b16 %v309
  %v342 = vunpack.c.l.b16 %v310
  %v343 = vunpack.c.l.b16 %v311
  %v344 = vunpack.c.l.b16 %v312
  %v345 = vunpack.c.l.b16 %v313
  %v346 = vunpack.c.l.b16 %v314
  %v347 = vpack.c.b16 %v332, %v331
  %v348 = vpack.c.b16 %v334, %v333
  %v349 = vpack.c.b16 %v336, %v335
  %v350 = vpack.c.b16 %v338, %v337
  %v351 = vpack.c.b16 %v340, %v339
  %v352 = vpack.c.b16 %v342, %v341
  %v353 = vpack.c.b16 %v344, %v343
  %v354 = vpack.c.b16 %v346, %v345
  %363 = vmatprep.subr.bf16.mxu0 0
  %364 = vmatpush1.bf16.msra.mxu0 %v275
  %365 = vmatprep.subr.bf16.mxu0 0
  %366 = vmatpush1.bf16.msra.mxu0 %v276
  %367 = vmatprep.subr.bf16.mxu0 0
  %368 = vmatpush1.bf16.msra.mxu0 %v277
  %369 = vmatprep.subr.bf16.mxu0 0
  %370 = vmatpush1.bf16.msra.mxu0 %v278
  %371 = vmatprep.subr.bf16.mxu0 0
  %372 = vmatpush1.bf16.msra.mxu0 %v279
  %373 = vmatprep.subr.bf16.mxu0 0
  %374 = vmatpush1.bf16.msra.mxu0 %v280
  %375 = vmatprep.subr.bf16.mxu0 0
  %376 = vmatpush1.bf16.msra.mxu0 %v281
  %377 = vmatprep.subr.bf16.mxu0 0
  %378 = vmatpush1.bf16.msra.mxu0 %v282
  %379 = vmatprep.subr.bf16.mxu0 0
  %380 = vmatpush1.bf16.msra.mxu0 0
  %381 = vmatprep.subr.bf16.mxu0 0
  %382 = vmatpush1.bf16.msra.mxu0 0
  %383 = vmatprep.subr.bf16.mxu0 0
  %384 = vmatpush1.bf16.msra.mxu0 0
  %385 = vmatprep.subr.bf16.mxu0 0
  %386 = vmatpush1.bf16.msra.mxu0 0
  %387 = vmatprep.subr.bf16.mxu0 0
  %388 = vmatpush1.bf16.msra.mxu0 0
  %389 = vmatprep.subr.bf16.mxu0 0
  %390 = vmatpush1.bf16.msra.mxu0 0
  %391 = vmatprep.subr.bf16.mxu0 0
  %392 = vmatpush1.bf16.msra.mxu0 0
  %393 = vmatprep.subr.bf16.mxu0 0
  %394 = vmatpush1.bf16.msra.mxu0 0
  %395 = vmatprep.mubr.bf16.mxu0 0
  %396 = vmatmul.mubr.bf16.gmra.mrb[0].mxu0 %v347
  %v397 = vpop.f32.mrb[0].mxu0
  %v398 = vadd.f32 0.0, %v397
  %v399 = vpop.f32.mrb[0].mxu0
  %v400 = vpop.f32.mrb[0].mxu0
  %v401 = vadd.f32 0.0, %v400
  %v402 = vpop.f32.mrb[0].mxu0
  %403 = vmatprep.mubr.bf16.mxu0 0
  %404 = vmatmul.mubr.bf16.gmra.mrb[0].mxu0 %v348
  %v405 = vpop.f32.mrb[0].mxu0
  %v406 = vadd.f32 0.0, %v405
  %v407 = vpop.f32.mrb[0].mxu0
  %v408 = vpop.f32.mrb[0].mxu0
  %v409 = vadd.f32 0.0, %v408
  %v410 = vpop.f32.mrb[0].mxu0
  %411 = vmatprep.mubr.bf16.mxu0 0
  %412 = vmatmul.mubr.bf16.gmra.mrb[0].mxu0 %v349
  %v413 = vpop.f32.mrb[0].mxu0
  %v414 = vadd.f32 0.0, %v413
  %v415 = vpop.f32.mrb[0].mxu0
  %v416 = vpop.f32.mrb[0].mxu0
  %v417 = vadd.f32 0.0, %v416
  %v418 = vpop.f32.mrb[0].mxu0
  %419 = vmatprep.mubr.bf16.mxu0 0
  %420 = vmatmul.mubr.bf16.gmra.mrb[0].mxu0 %v350
  %v421 = vpop.f32.mrb[0].mxu0
  %v422 = vadd.f32 0.0, %v421
  %v423 = vpop.f32.mrb[0].mxu0
  %v424 = vpop.f32.mrb[0].mxu0
  %v425 = vadd.f32 0.0, %v424
  %v426 = vpop.f32.mrb[0].mxu0
  %427 = vmatprep.mubr.bf16.mxu0 0
  %428 = vmatmul.mubr.bf16.gmra.mrb[0].mxu0 %v351
  %v429 = vpop.f32.mrb[0].mxu0
  %v430 = vadd.f32 0.0, %v429
  %v431 = vpop.f32.mrb[0].mxu0
  %v432 = vpop.f32.mrb[0].mxu0
  %v433 = vadd.f32 0.0, %v432
  %v434 = vpop.f32.mrb[0].mxu0
  %435 = vmatprep.mubr.bf16.mxu0 0
  %436 = vmatmul.mubr.bf16.gmra.mrb[0].mxu0 %v352
  %v437 = vpop.f32.mrb[0].mxu0
  %v438 = vadd.f32 0.0, %v437
  %v439 = vpop.f32.mrb[0].mxu0
  %v440 = vpop.f32.mrb[0].mxu0
  %v441 = vadd.f32 0.0, %v440
  %v442 = vpop.f32.mrb[0].mxu0
  %443 = vmatprep.mubr.bf16.mxu0 0
  %444 = vmatmul.mubr.bf16.gmra.mrb[0].mxu0 %v353
  %v445 = vpop.f32.mrb[0].mxu0
  %v446 = vadd.f32 0.0, %v445
  %v447 = vpop.f32.mrb[0].mxu0
  %v448 = vpop.f32.mrb[0].mxu0
  %v449 = vadd.f32 0.0, %v448
  %v450 = vpop.f32.mrb[0].mxu0
  %451 = vmatprep.mubr.bf16.mxu0 0
  %452 = vmatmul.mubr.bf16.gmra.mrb[0].mxu0 %v354
  %v453 = vpop.f32.mrb[0].mxu0
  %v454 = vadd.f32 0.0, %v453
  %v455 = vpop.f32.mrb[0].mxu0
  %v456 = vpop.f32.mrb[0].mxu0
  %v457 = vadd.f32 0.0, %v456
  %v458 = vpop.f32.mrb[0].mxu0
  %459 = vdwg.mxu0
  %v460 = vadd.f32 %v283, %v398
  %v461 = vadd.f32 %v284, %v401
  %v462 = vadd.f32 %v285, %v406
  %v463 = vadd.f32 %v286, %v409
  %v464 = vadd.f32 %v287, %v414
  %v465 = vadd.f32 %v288, %v417
  %v466 = vadd.f32 %v289, %v422
  %v467 = vadd.f32 %v290, %v425
  %v468 = vadd.f32 %v291, %v430
  %v469 = vadd.f32 %v292, %v433
  %v470 = vadd.f32 %v293, %v438
  %v471 = vadd.f32 %v294, %v441
  %v472 = vadd.f32 %v295, %v446
  %v473 = vadd.f32 %v296, %v449
  %v474 = vadd.f32 %v297, %v454
  %v475 = vadd.f32 %v298, %v457
  %476 = vst [vmem:[#allocation2] sm:$0xff] %v460
  %477 = vst [vmem:[#allocation2 + $0x8] sm:$0xff] %v461
  %478 = vst [vmem:[#allocation2 + $0x10] sm:$0xff] %v462
  %479 = vst [vmem:[#allocation2 + $0x18] sm:$0xff] %v463
  %480 = vst [vmem:[#allocation2 + $0x20] sm:$0xff] %v464
  %481 = vst [vmem:[#allocation2 + $0x28] sm:$0xff] %v465
  %482 = vst [vmem:[#allocation2 + $0x30] sm:$0xff] %v466
  %483 = vst [vmem:[#allocation2 + $0x38] sm:$0xff] %v467
  %484 = vst [vmem:[#allocation2 + $0x40] sm:$0xff] %v468
  %485 = vst [vmem:[#allocation2 + $0x48] sm:$0xff] %v469
  %486 = vst [vmem:[#allocation2 + $0x50] sm:$0xff] %v470
  %487 = vst [vmem:[#allocation2 + $0x58] sm:$0xff] %v471
  %488 = vst [vmem:[#allocation2 + $0x60] sm:$0xff] %v472
  %489 = vst [vmem:[#allocation2 + $0x68] sm:$0xff] %v473
  %490 = vst [vmem:[#allocation2 + $0x70] sm:$0xff] %v474
  %491 = vst [vmem:[#allocation2 + $0x78] sm:$0xff] %v475
  // Predicated region
  $region22: #{gcn_encoder_forward.3} parent=0 // pred_check
    %p492 = pneg %p18
  $region23: #{gcn_encoder_forward.3} parent=0 // pred_check_branch
    %494 = sbr.rel (%p492) target = $region25
  $region24: #{gcn_encoder_forward.3} parent=0 // pred_region
    %v495 = vld [vmem:[#allocation2] sm:$0xff]
    %v496 = vld [vmem:[#allocation2 + $0x8] sm:$0xff]
    %v497 = vld [vmem:[#allocation2 + $0x10] sm:$0xff]
    %v498 = vld [vmem:[#allocation2 + $0x18] sm:$0xff]
    %v499 = vld [vmem:[#allocation2 + $0x20] sm:$0xff]
    %v500 = vld [vmem:[#allocation2 + $0x28] sm:$0xff]
    %v501 = vld [vmem:[#allocation2 + $0x30] sm:$0xff]
    %v502 = vld [vmem:[#allocation2 + $0x38] sm:$0xff]
    %v503 = vld [vmem:[#allocation2 + $0x40] sm:$0xff]
    %v504 = vld [vmem:[#allocation2 + $0x48] sm:$0xff]
    %v505 = vld [vmem:[#allocation2 + $0x50] sm:$0xff]
    %v506 = vld [vmem:[#allocation2 + $0x58] sm:$0xff]
    %v507 = vld [vmem:[#allocation2 + $0x60] sm:$0xff]
    %v508 = vld [vmem:[#allocation2 + $0x68] sm:$0xff]
    %v509 = vld [vmem:[#allocation2 + $0x70] sm:$0xff]
    %v510 = vld [vmem:[#allocation2 + $0x78] sm:$0xff]
    %511 = vst [vmem:[%s4] sm:$0xff] %v495
    %512 = vst [vmem:[%s4 + $0x8] sm:$0xff] %v496
    %513 = vst [vmem:[%s4 + $0x10] sm:$0xff] %v497
    %514 = vst [vmem:[%s4 + $0x18] sm:$0xff] %v498
    %515 = vst [vmem:[%s4 + $0x20] sm:$0xff] %v499
    %516 = vst [vmem:[%s4 + $0x28] sm:$0xff] %v500
    %517 = vst [vmem:[%s4 + $0x30] sm:$0xff] %v501
    %518 = vst [vmem:[%s4 + $0x38] sm:$0xff] %v502
    %519 = vst [vmem:[%s4 + $0x40] sm:$0xff] %v503
    %520 = vst [vmem:[%s4 + $0x48] sm:$0xff] %v504
    %521 = vst [vmem:[%s4 + $0x50] sm:$0xff] %v505
    %522 = vst [vmem:[%s4 + $0x58] sm:$0xff] %v506
    %523 = vst [vmem:[%s4 + $0x60] sm:$0xff] %v507
    %524 = vst [vmem:[%s4 + $0x68] sm:$0xff] %v508
    %525 = vst [vmem:[%s4 + $0x70] sm:$0xff] %v509
    %526 = vst [vmem:[%s4 + $0x78] sm:$0xff] %v510
  $region25: #{gcn_encoder_forward.3} parent=0 // pred_fallthru
    _
  // Predicated region
  $region26: #{gcn_encoder_forward.3} parent=0 // pred_check
    _
  $region27: #{gcn_encoder_forward.3} parent=0 // pred_check_branch
    %528 = sbr.rel (0) target = $region29
  $region28: #{gcn_encoder_forward.3} parent=0 // pred_region
    _
  $region29: #{gcn_encoder_forward.3} parent=0 // pred_fallthru
    _
  // Predicated region
  $region30: #{gcn_encoder_forward.3} parent=0 // pred_check
    _
  $region31: #{gcn_encoder_forward.3} parent=0 // pred_check_branch
    %530 = sbr.rel (0) target = $region33
  $region32: #{gcn_encoder_forward.3} parent=0 // pred_region
    _
  $region33: #{gcn_encoder_forward.3} parent=0 // pred_fallthru
    _

// kernel: gcn_encoder_forward.2
$region0: #{gcn_encoder_forward.2}
  #allocation0 [shape = 'u32[]', space=smem, size = 0x4, offset = 0x4, fixed_abs, tag = 'smem constant byte address 0x4 - core index']
  #allocation1 [shape = 'u32[144,128]{1,0:T(1,128)}', space=vmem, size = 0x12000, scoped, tag = 'internal scratch']
  #allocation2 [shape = 'f32[128,128]{1,0:T(8,128)}', space=vmem, size = 0x10000, scoped, tag = 'scratch operand']
  %s0 = inlined_call_operand.vmem [shape: bf16[128,128], index: 0, kind: input, shape index: {}]
  %s1 = inlined_call_operand.vmem [shape: bf16[128,128], index: 1, kind: input, shape index: {}]
  %s2 = inlined_call_operand.vmem [shape: bf16[128,128], index: 2, kind: input, shape index: {}]
  %s3 = inlined_call_operand.vmem [shape: f32[1,128], index: 3, kind: input, shape index: {}]
  %s4 = inlined_call_operand.vmem [shape: bf16[128,128], index: 4, kind: output, shape index: {}]
  %s5 = sld [smem:[#allocation0]]
  $region34: #{gcn_encoder_forward.2} parent=0
    _
  %s7 = ssub.s32 1, %s5
  %s8 = scalar_select 0, %s7, %s5
  // Predicated region
  $region2: #{gcn_encoder_forward.2} parent=0 // pred_check
    _
  $region3: #{gcn_encoder_forward.2} parent=0 // pred_check_branch
    %10 = sbr.rel (0) target = $region5
  $region4: #{gcn_encoder_forward.2} parent=0 // pred_region
    _
  $region5: #{gcn_encoder_forward.2} parent=0 // pred_fallthru
    _
  // Predicated region
  $region6: #{gcn_encoder_forward.2} parent=0 // pred_check
    _
  $region7: #{gcn_encoder_forward.2} parent=0 // pred_check_branch
    %12 = sbr.rel (0) target = $region9
  $region8: #{gcn_encoder_forward.2} parent=0 // pred_region
    _
  $region9: #{gcn_encoder_forward.2} parent=0 // pred_fallthru
    _
  // Predicated region
  $region10: #{gcn_encoder_forward.2} parent=0 // pred_check
    _
  $region11: #{gcn_encoder_forward.2} parent=0 // pred_check_branch
    %14 = sbr.rel (0) target = $region13
  $region12: #{gcn_encoder_forward.2} parent=0 // pred_region
    _
  $region13: #{gcn_encoder_forward.2} parent=0 // pred_fallthru
    _
  // Predicated region
  $region14: #{gcn_encoder_forward.2} parent=0 // pred_check
    _
  $region15: #{gcn_encoder_forward.2} parent=0 // pred_check_branch
    %16 = sbr.rel (0) target = $region17
  $region16: #{gcn_encoder_forward.2} parent=0 // pred_region
    _
  $region17: #{gcn_encoder_forward.2} parent=0 // pred_fallthru
    _
  %p18 = scmp.eq.s32.totalorder 0, 0
  // Predicated region
  $region18: #{gcn_encoder_forward.2} parent=0 // pred_check
    %p19 = pneg %p18
  $region19: #{gcn_encoder_forward.2} parent=0 // pred_check_branch
    %21 = sbr.rel (%p19) target = $region21
  $region20: #{gcn_encoder_forward.2} parent=0 // pred_region
    %v22 = vld [vmem:[%s3] sm:$0x1]
    %v24 = vlaneseq
    %v25 = vshrl.u32 %v24, 7
    %v26 = vsub.s32 0, %v25
    %v27 = vrot.slane %v22, %v26
    %29 = vst [vmem:[#allocation2] sm:$0xff] %v27
    %30 = vst [vmem:[#allocation2 + $0x8] sm:$0xff] %v27
    %31 = vst [vmem:[#allocation2 + $0x10] sm:$0xff] %v27
    %32 = vst [vmem:[#allocation2 + $0x18] sm:$0xff] %v27
    %33 = vst [vmem:[#allocation2 + $0x20] sm:$0xff] %v27
    %34 = vst [vmem:[#allocation2 + $0x28] sm:$0xff] %v27
    %35 = vst [vmem:[#allocation2 + $0x30] sm:$0xff] %v27
    %36 = vst [vmem:[#allocation2 + $0x38] sm:$0xff] %v27
    %37 = vst [vmem:[#allocation2 + $0x40] sm:$0xff] %v27
    %38 = vst [vmem:[#allocation2 + $0x48] sm:$0xff] %v27
    %39 = vst [vmem:[#allocation2 + $0x50] sm:$0xff] %v27
    %40 = vst [vmem:[#allocation2 + $0x58] sm:$0xff] %v27
    %41 = vst [vmem:[#allocation2 + $0x60] sm:$0xff] %v27
    %42 = vst [vmem:[#allocation2 + $0x68] sm:$0xff] %v27
    %43 = vst [vmem:[#allocation2 + $0x70] sm:$0xff] %v27
    %44 = vst [vmem:[#allocation2 + $0x78] sm:$0xff] %v27
  $region21: #{gcn_encoder_forward.2} parent=0 // pred_fallthru
    _
  %s45 = smul.u32 0, 128
  %s46 = sshra.s32 %s45, 3
  %s47 = sand.u32 %s45, 7
  %s48 = smul.addr %s46, 4
  %s49 = scalar_lea.vmem %s1, %s48
  %v50 = vld [vmem:[%s49] sm:$0xf]
  %v51 = vld [vmem:[%s49 + $0x4] sm:$0xf]
  %v52 = vld [vmem:[%s49 + $0x8] sm:$0xf]
  %v53 = vld [vmem:[%s49 + $0xc] sm:$0xf]
  %v54 = vld [vmem:[%s49 + $0x10] sm:$0xf]
  %v55 = vld [vmem:[%s49 + $0x14] sm:$0xf]
  %v56 = vld [vmem:[%s49 + $0x18] sm:$0xf]
  %v57 = vld [vmem:[%s49 + $0x1c] sm:$0xf]
  %v58 = vld [vmem:[%s49 + $0x20] sm:$0xf]
  %v59 = vld [vmem:[%s49 + $0x24] sm:$0xf]
  %v60 = vld [vmem:[%s49 + $0x28] sm:$0xf]
  %v61 = vld [vmem:[%s49 + $0x2c] sm:$0xf]
  %v62 = vld [vmem:[%s49 + $0x30] sm:$0xf]
  %v63 = vld [vmem:[%s49 + $0x34] sm:$0xf]
  %v64 = vld [vmem:[%s49 + $0x38] sm:$0xf]
  %v65 = vld [vmem:[%s49 + $0x3c] sm:$0xf]
  %v66 = vld [vmem:[%s2] sm:$0xf]
  %v67 = vld [vmem:[%s2 + $0x4] sm:$0xf]
  %v68 = vld [vmem:[%s2 + $0x8] sm:$0xf]
  %v69 = vld [vmem:[%s2 + $0xc] sm:$0xf]
  %v70 = vld [vmem:[%s2 + $0x10] sm:$0xf]
  %v71 = vld [vmem:[%s2 + $0x14] sm:$0xf]
  %v72 = vld [vmem:[%s2 + $0x18] sm:$0xf]
  %v73 = vld [vmem:[%s2 + $0x1c] sm:$0xf]
  %v74 = vld [vmem:[%s2 + $0x20] sm:$0xf]
  %v75 = vld [vmem:[%s2 + $0x24] sm:$0xf]
  %v76 = vld [vmem:[%s2 + $0x28] sm:$0xf]
  %v77 = vld [vmem:[%s2 + $0x2c] sm:$0xf]
  %v78 = vld [vmem:[%s2 + $0x30] sm:$0xf]
  %v79 = vld [vmem:[%s2 + $0x34] sm:$0xf]
  %v80 = vld [vmem:[%s2 + $0x38] sm:$0xf]
  %v81 = vld [vmem:[%s2 + $0x3c] sm:$0xf]
  %v98 = vunpack.c.l.b16 %v50
  %v99 = vunpack.c.l.b16 %v51
  %v100 = vunpack.c.l.b16 %v52
  %v101 = vunpack.c.l.b16 %v53
  %v102 = vunpack.c.l.b16 %v54
  %v103 = vunpack.c.l.b16 %v55
  %v104 = vunpack.c.l.b16 %v56
  %v105 = vunpack.c.l.b16 %v57
  %v106 = vunpack.c.l.b16 %v58
  %v107 = vunpack.c.l.b16 %v59
  %v108 = vunpack.c.l.b16 %v60
  %v109 = vunpack.c.l.b16 %v61
  %v110 = vunpack.c.l.b16 %v62
  %v111 = vunpack.c.l.b16 %v63
  %v112 = vunpack.c.l.b16 %v64
  %v113 = vunpack.c.l.b16 %v65
  %v114 = vpack.c.b16 %v99, %v98
  %v115 = vpack.c.b16 %v101, %v100
  %v116 = vpack.c.b16 %v103, %v102
  %v117 = vpack.c.b16 %v105, %v104
  %v118 = vpack.c.b16 %v107, %v106
  %v119 = vpack.c.b16 %v109, %v108
  %v120 = vpack.c.b16 %v111, %v110
  %v121 = vpack.c.b16 %v113, %v112
  %v146 = vunpack.c.l.b16 %v66
  %v147 = vunpack.c.l.b16 %v67
  %v148 = vunpack.c.l.b16 %v68
  %v149 = vunpack.c.l.b16 %v69
  %v150 = vunpack.c.l.b16 %v70
  %v151 = vunpack.c.l.b16 %v71
  %v152 = vunpack.c.l.b16 %v72
  %v153 = vunpack.c.l.b16 %v73
  %v154 = vunpack.c.l.b16 %v74
  %v155 = vunpack.c.l.b16 %v75
  %v156 = vunpack.c.l.b16 %v76
  %v157 = vunpack.c.l.b16 %v77
  %v158 = vunpack.c.l.b16 %v78
  %v159 = vunpack.c.l.b16 %v79
  %v160 = vunpack.c.l.b16 %v80
  %v161 = vunpack.c.l.b16 %v81
  %v162 = vpack.c.b16 %v147, %v146
  %v163 = vpack.c.b16 %v149, %v148
  %v164 = vpack.c.b16 %v151, %v150
  %v165 = vpack.c.b16 %v153, %v152
  %v166 = vpack.c.b16 %v155, %v154
  %v167 = vpack.c.b16 %v157, %v156
  %v168 = vpack.c.b16 %v159, %v158
  %v169 = vpack.c.b16 %v161, %v160
  %178 = vmatprep.subr.bf16.mxu0 0
  %179 = vmatpush1.bf16.msra.mxu0 %v162
  %180 = vmatprep.subr.bf16.mxu0 0
  %181 = vmatpush1.bf16.msra.mxu0 %v163
  %182 = vmatprep.subr.bf16.mxu0 0
  %183 = vmatpush1.bf16.msra.mxu0 %v164
  %184 = vmatprep.subr.bf16.mxu0 0
  %185 = vmatpush1.bf16.msra.mxu0 %v165
  %186 = vmatprep.subr.bf16.mxu0 0
  %187 = vmatpush1.bf16.msra.mxu0 %v166
  %188 = vmatprep.subr.bf16.mxu0 0
  %189 = vmatpush1.bf16.msra.mxu0 %v167
  %190 = vmatprep.subr.bf16.mxu0 0
  %191 = vmatpush1.bf16.msra.mxu0 %v168
  %192 = vmatprep.subr.bf16.mxu0 0
  %193 = vmatpush1.bf16.msra.mxu0 %v169
  %194 = vmatprep.subr.bf16.mxu0 0
  %195 = vmatpush1.bf16.msra.mxu0 0
  %196 = vmatprep.subr.bf16.mxu0 0
  %197 = vmatpush1.bf16.msra.mxu0 0
  %198 = vmatprep.subr.bf16.mxu0 0
  %199 = vmatpush1.bf16.msra.mxu0 0
  %200 = vmatprep.subr.bf16.mxu0 0
  %201 = vmatpush1.bf16.msra.mxu0 0
  %202 = vmatprep.subr.bf16.mxu0 0
  %203 = vmatpush1.bf16.msra.mxu0 0
  %204 = vmatprep.subr.bf16.mxu0 0
  %205 = vmatpush1.bf16.msra.mxu0 0
  %206 = vmatprep.subr.bf16.mxu0 0
  %207 = vmatpush1.bf16.msra.mxu0 0
  %208 = vmatprep.subr.bf16.mxu0 0
  %209 = vmatpush1.bf16.msra.mxu0 0
  %210 = vmatprep.mubr.bf16.mxu0 0
  %211 = vmatmul.mubr.bf16.gmra.mrb[0].mxu0 %v114
  %v212 = vpop.f32.mrb[0].mxu0
  %v213 = vadd.f32 0.0, %v212
  %v214 = vpop.f32.mrb[0].mxu0
  %v215 = vpop.f32.mrb[0].mxu0
  %v216 = vadd.f32 0.0, %v215
  %v217 = vpop.f32.mrb[0].mxu0
  %218 = vmatprep.mubr.bf16.mxu0 0
  %219 = vmatmul.mubr.bf16.gmra.mrb[0].mxu0 %v115
  %v220 = vpop.f32.mrb[0].mxu0
  %v221 = vadd.f32 0.0, %v220
  %v222 = vpop.f32.mrb[0].mxu0
  %v223 = vpop.f32.mrb[0].mxu0
  %v224 = vadd.f32 0.0, %v223
  %v225 = vpop.f32.mrb[0].mxu0
  %226 = vmatprep.mubr.bf16.mxu0 0
  %227 = vmatmul.mubr.bf16.gmra.mrb[0].mxu0 %v116
  %v228 = vpop.f32.mrb[0].mxu0
  %v229 = vadd.f32 0.0, %v228
  %v230 = vpop.f32.mrb[0].mxu0
  %v231 = vpop.f32.mrb[0].mxu0
  %v232 = vadd.f32 0.0, %v231
  %v233 = vpop.f32.mrb[0].mxu0
  %234 = vmatprep.mubr.bf16.mxu0 0
  %235 = vmatmul.mubr.bf16.gmra.mrb[0].mxu0 %v117
  %v236 = vpop.f32.mrb[0].mxu0
  %v237 = vadd.f32 0.0, %v236
  %v238 = vpop.f32.mrb[0].mxu0
  %v239 = vpop.f32.mrb[0].mxu0
  %v240 = vadd.f32 0.0, %v239
  %v241 = vpop.f32.mrb[0].mxu0
  %242 = vmatprep.mubr.bf16.mxu0 0
  %243 = vmatmul.mubr.bf16.gmra.mrb[0].mxu0 %v118
  %v244 = vpop.f32.mrb[0].mxu0
  %v245 = vadd.f32 0.0, %v244
  %v246 = vpop.f32.mrb[0].mxu0
  %v247 = vpop.f32.mrb[0].mxu0
  %v248 = vadd.f32 0.0, %v247
  %v249 = vpop.f32.mrb[0].mxu0
  %250 = vmatprep.mubr.bf16.mxu0 0
  %251 = vmatmul.mubr.bf16.gmra.mrb[0].mxu0 %v119
  %v252 = vpop.f32.mrb[0].mxu0
  %v253 = vadd.f32 0.0, %v252
  %v254 = vpop.f32.mrb[0].mxu0
  %v255 = vpop.f32.mrb[0].mxu0
  %v256 = vadd.f32 0.0, %v255
  %v257 = vpop.f32.mrb[0].mxu0
  %258 = vmatprep.mubr.bf16.mxu0 0
  %259 = vmatmul.mubr.bf16.gmra.mrb[0].mxu0 %v120
  %v260 = vpop.f32.mrb[0].mxu0
  %v261 = vadd.f32 0.0, %v260
  %v262 = vpop.f32.mrb[0].mxu0
  %v263 = vpop.f32.mrb[0].mxu0
  %v264 = vadd.f32 0.0, %v263
  %v265 = vpop.f32.mrb[0].mxu0
  %266 = vmatprep.mubr.bf16.mxu0 0
  %267 = vmatmul.mubr.bf16.gmra.mrb[0].mxu0 %v121
  %v268 = vpop.f32.mrb[0].mxu0
  %v269 = vadd.f32 0.0, %v268
  %v270 = vpop.f32.mrb[0].mxu0
  %v271 = vpop.f32.mrb[0].mxu0
  %v272 = vadd.f32 0.0, %v271
  %v273 = vpop.f32.mrb[0].mxu0
  %274 = vdwg.mxu0
  %v275 = vpack.c.bf16 %v216, %v213
  %v276 = vpack.c.bf16 %v224, %v221
  %v277 = vpack.c.bf16 %v232, %v229
  %v278 = vpack.c.bf16 %v240, %v237
  %v279 = vpack.c.bf16 %v248, %v245
  %v280 = vpack.c.bf16 %v256, %v253
  %v281 = vpack.c.bf16 %v264, %v261
  %v282 = vpack.c.bf16 %v272, %v269
  %v283 = vld [vmem:[#allocation2] sm:$0xff]
  %v284 = vld [vmem:[#allocation2 + $0x8] sm:$0xff]
  %v285 = vld [vmem:[#allocation2 + $0x10] sm:$0xff]
  %v286 = vld [vmem:[#allocation2 + $0x18] sm:$0xff]
  %v287 = vld [vmem:[#allocation2 + $0x20] sm:$0xff]
  %v288 = vld [vmem:[#allocation2 + $0x28] sm:$0xff]
  %v289 = vld [vmem:[#allocation2 + $0x30] sm:$0xff]
  %v290 = vld [vmem:[#allocation2 + $0x38] sm:$0xff]
  %v291 = vld [vmem:[#allocation2 + $0x40] sm:$0xff]
  %v292 = vld [vmem:[#allocation2 + $0x48] sm:$0xff]
  %v293 = vld [vmem:[#allocation2 + $0x50] sm:$0xff]
  %v294 = vld [vmem:[#allocation2 + $0x58] sm:$0xff]
  %v295 = vld [vmem:[#allocation2 + $0x60] sm:$0xff]
  %v296 = vld [vmem:[#allocation2 + $0x68] sm:$0xff]
  %v297 = vld [vmem:[#allocation2 + $0x70] sm:$0xff]
  %v298 = vld [vmem:[#allocation2 + $0x78] sm:$0xff]
  %v299 = vld [vmem:[%s0] sm:$0xf]
  %v300 = vld [vmem:[%s0 + $0x4] sm:$0xf]
  %v301 = vld [vmem:[%s0 + $0x8] sm:$0xf]
  %v302 = vld [vmem:[%s0 + $0xc] sm:$0xf]
  %v303 = vld [vmem:[%s0 + $0x10] sm:$0xf]
  %v304 = vld [vmem:[%s0 + $0x14] sm:$0xf]
  %v305 = vld [vmem:[%s0 + $0x18] sm:$0xf]
  %v306 = vld [vmem:[%s0 + $0x1c] sm:$0xf]
  %v307 = vld [vmem:[%s0 + $0x20] sm:$0xf]
  %v308 = vld [vmem:[%s0 + $0x24] sm:$0xf]
  %v309 = vld [vmem:[%s0 + $0x28] sm:$0xf]
  %v310 = vld [vmem:[%s0 + $0x2c] sm:$0xf]
  %v311 = vld [vmem:[%s0 + $0x30] sm:$0xf]
  %v312 = vld [vmem:[%s0 + $0x34] sm:$0xf]
  %v313 = vld [vmem:[%s0 + $0x38] sm:$0xf]
  %v314 = vld [vmem:[%s0 + $0x3c] sm:$0xf]
  %v331 = vunpack.c.l.b16 %v299
  %v332 = vunpack.c.l.b16 %v300
  %v333 = vunpack.c.l.b16 %v301
  %v334 = vunpack.c.l.b16 %v302
  %v335 = vunpack.c.l.b16 %v303
  %v336 = vunpack.c.l.b16 %v304
  %v337 = vunpack.c.l.b16 %v305
  %v338 = vunpack.c.l.b16 %v306
  %v339 = vunpack.c.l.b16 %v307
  %v340 = vunpack.c.l.b16 %v308
  %v341 = vunpack.c.l.b16 %v309
  %v342 = vunpack.c.l.b16 %v310
  %v343 = vunpack.c.l.b16 %v311
  %v344 = vunpack.c.l.b16 %v312
  %v345 = vunpack.c.l.b16 %v313
  %v346 = vunpack.c.l.b16 %v314
  %v347 = vpack.c.b16 %v332, %v331
  %v348 = vpack.c.b16 %v334, %v333
  %v349 = vpack.c.b16 %v336, %v335
  %v350 = vpack.c.b16 %v338, %v337
  %v351 = vpack.c.b16 %v340, %v339
  %v352 = vpack.c.b16 %v342, %v341
  %v353 = vpack.c.b16 %v344, %v343
  %v354 = vpack.c.b16 %v346, %v345
  %363 = vmatprep.subr.bf16.mxu0 0
  %364 = vmatpush1.bf16.msra.mxu0 %v275
  %365 = vmatprep.subr.bf16.mxu0 0
  %366 = vmatpush1.bf16.msra.mxu0 %v276
  %367 = vmatprep.subr.bf16.mxu0 0
  %368 = vmatpush1.bf16.msra.mxu0 %v277
  %369 = vmatprep.subr.bf16.mxu0 0
  %370 = vmatpush1.bf16.msra.mxu0 %v278
  %371 = vmatprep.subr.bf16.mxu0 0
  %372 = vmatpush1.bf16.msra.mxu0 %v279
  %373 = vmatprep.subr.bf16.mxu0 0
  %374 = vmatpush1.bf16.msra.mxu0 %v280
  %375 = vmatprep.subr.bf16.mxu0 0
  %376 = vmatpush1.bf16.msra.mxu0 %v281
  %377 = vmatprep.subr.bf16.mxu0 0
  %378 = vmatpush1.bf16.msra.mxu0 %v282
  %379 = vmatprep.subr.bf16.mxu0 0
  %380 = vmatpush1.bf16.msra.mxu0 0
  %381 = vmatprep.subr.bf16.mxu0 0
  %382 = vmatpush1.bf16.msra.mxu0 0
  %383 = vmatprep.subr.bf16.mxu0 0
  %384 = vmatpush1.bf16.msra.mxu0 0
  %385 = vmatprep.subr.bf16.mxu0 0
  %386 = vmatpush1.bf16.msra.mxu0 0
  %387 = vmatprep.subr.bf16.mxu0 0
  %388 = vmatpush1.bf16.msra.mxu0 0
  %389 = vmatprep.subr.bf16.mxu0 0
  %390 = vmatpush1.bf16.msra.mxu0 0
  %391 = vmatprep.subr.bf16.mxu0 0
  %392 = vmatpush1.bf16.msra.mxu0 0
  %393 = vmatprep.subr.bf16.mxu0 0
  %394 = vmatpush1.bf16.msra.mxu0 0
  %395 = vmatprep.mubr.bf16.mxu0 0
  %396 = vmatmul.mubr.bf16.gmra.mrb[0].mxu0 %v347
  %v397 = vpop.f32.mrb[0].mxu0
  %v398 = vadd.f32 0.0, %v397
  %v399 = vpop.f32.mrb[0].mxu0
  %v400 = vpop.f32.mrb[0].mxu0
  %v401 = vadd.f32 0.0, %v400
  %v402 = vpop.f32.mrb[0].mxu0
  %403 = vmatprep.mubr.bf16.mxu0 0
  %404 = vmatmul.mubr.bf16.gmra.mrb[0].mxu0 %v348
  %v405 = vpop.f32.mrb[0].mxu0
  %v406 = vadd.f32 0.0, %v405
  %v407 = vpop.f32.mrb[0].mxu0
  %v408 = vpop.f32.mrb[0].mxu0
  %v409 = vadd.f32 0.0, %v408
  %v410 = vpop.f32.mrb[0].mxu0
  %411 = vmatprep.mubr.bf16.mxu0 0
  %412 = vmatmul.mubr.bf16.gmra.mrb[0].mxu0 %v349
  %v413 = vpop.f32.mrb[0].mxu0
  %v414 = vadd.f32 0.0, %v413
  %v415 = vpop.f32.mrb[0].mxu0
  %v416 = vpop.f32.mrb[0].mxu0
  %v417 = vadd.f32 0.0, %v416
  %v418 = vpop.f32.mrb[0].mxu0
  %419 = vmatprep.mubr.bf16.mxu0 0
  %420 = vmatmul.mubr.bf16.gmra.mrb[0].mxu0 %v350
  %v421 = vpop.f32.mrb[0].mxu0
  %v422 = vadd.f32 0.0, %v421
  %v423 = vpop.f32.mrb[0].mxu0
  %v424 = vpop.f32.mrb[0].mxu0
  %v425 = vadd.f32 0.0, %v424
  %v426 = vpop.f32.mrb[0].mxu0
  %427 = vmatprep.mubr.bf16.mxu0 0
  %428 = vmatmul.mubr.bf16.gmra.mrb[0].mxu0 %v351
  %v429 = vpop.f32.mrb[0].mxu0
  %v430 = vadd.f32 0.0, %v429
  %v431 = vpop.f32.mrb[0].mxu0
  %v432 = vpop.f32.mrb[0].mxu0
  %v433 = vadd.f32 0.0, %v432
  %v434 = vpop.f32.mrb[0].mxu0
  %435 = vmatprep.mubr.bf16.mxu0 0
  %436 = vmatmul.mubr.bf16.gmra.mrb[0].mxu0 %v352
  %v437 = vpop.f32.mrb[0].mxu0
  %v438 = vadd.f32 0.0, %v437
  %v439 = vpop.f32.mrb[0].mxu0
  %v440 = vpop.f32.mrb[0].mxu0
  %v441 = vadd.f32 0.0, %v440
  %v442 = vpop.f32.mrb[0].mxu0
  %443 = vmatprep.mubr.bf16.mxu0 0
  %444 = vmatmul.mubr.bf16.gmra.mrb[0].mxu0 %v353
  %v445 = vpop.f32.mrb[0].mxu0
  %v446 = vadd.f32 0.0, %v445
  %v447 = vpop.f32.mrb[0].mxu0
  %v448 = vpop.f32.mrb[0].mxu0
  %v449 = vadd.f32 0.0, %v448
  %v450 = vpop.f32.mrb[0].mxu0
  %451 = vmatprep.mubr.bf16.mxu0 0
  %452 = vmatmul.mubr.bf16.gmra.mrb[0].mxu0 %v354
  %v453 = vpop.f32.mrb[0].mxu0
  %v454 = vadd.f32 0.0, %v453
  %v455 = vpop.f32.mrb[0].mxu0
  %v456 = vpop.f32.mrb[0].mxu0
  %v457 = vadd.f32 0.0, %v456
  %v458 = vpop.f32.mrb[0].mxu0
  %459 = vdwg.mxu0
  %v460 = vadd.f32 %v283, %v398
  %v461 = vadd.f32 %v284, %v401
  %v462 = vadd.f32 %v285, %v406
  %v463 = vadd.f32 %v286, %v409
  %v464 = vadd.f32 %v287, %v414
  %v465 = vadd.f32 %v288, %v417
  %v466 = vadd.f32 %v289, %v422
  %v467 = vadd.f32 %v290, %v425
  %v468 = vadd.f32 %v291, %v430
  %v469 = vadd.f32 %v292, %v433
  %v470 = vadd.f32 %v293, %v438
  %v471 = vadd.f32 %v294, %v441
  %v472 = vadd.f32 %v295, %v446
  %v473 = vadd.f32 %v296, %v449
  %v474 = vadd.f32 %v297, %v454
  %v475 = vadd.f32 %v298, %v457
  %476 = vst [vmem:[#allocation2] sm:$0xff] %v460
  %477 = vst [vmem:[#allocation2 + $0x8] sm:$0xff] %v461
  %478 = vst [vmem:[#allocation2 + $0x10] sm:$0xff] %v462
  %479 = vst [vmem:[#allocation2 + $0x18] sm:$0xff] %v463
  %480 = vst [vmem:[#allocation2 + $0x20] sm:$0xff] %v464
  %481 = vst [vmem:[#allocation2 + $0x28] sm:$0xff] %v465
  %482 = vst [vmem:[#allocation2 + $0x30] sm:$0xff] %v466
  %483 = vst [vmem:[#allocation2 + $0x38] sm:$0xff] %v467
  %484 = vst [vmem:[#allocation2 + $0x40] sm:$0xff] %v468
  %485 = vst [vmem:[#allocation2 + $0x48] sm:$0xff] %v469
  %486 = vst [vmem:[#allocation2 + $0x50] sm:$0xff] %v470
  %487 = vst [vmem:[#allocation2 + $0x58] sm:$0xff] %v471
  %488 = vst [vmem:[#allocation2 + $0x60] sm:$0xff] %v472
  %489 = vst [vmem:[#allocation2 + $0x68] sm:$0xff] %v473
  %490 = vst [vmem:[#allocation2 + $0x70] sm:$0xff] %v474
  %491 = vst [vmem:[#allocation2 + $0x78] sm:$0xff] %v475
  // Predicated region
  $region22: #{gcn_encoder_forward.2} parent=0 // pred_check
    %p492 = pneg %p18
  $region23: #{gcn_encoder_forward.2} parent=0 // pred_check_branch
    %494 = sbr.rel (%p492) target = $region25
  $region24: #{gcn_encoder_forward.2} parent=0 // pred_region
    %v495 = vld [vmem:[#allocation2] sm:$0xff]
    %v496 = vld [vmem:[#allocation2 + $0x8] sm:$0xff]
    %v497 = vld [vmem:[#allocation2 + $0x10] sm:$0xff]
    %v498 = vld [vmem:[#allocation2 + $0x18] sm:$0xff]
    %v499 = vld [vmem:[#allocation2 + $0x20] sm:$0xff]
    %v500 = vld [vmem:[#allocation2 + $0x28] sm:$0xff]
    %v501 = vld [vmem:[#allocation2 + $0x30] sm:$0xff]
    %v502 = vld [vmem:[#allocation2 + $0x38] sm:$0xff]
    %v503 = vld [vmem:[#allocation2 + $0x40] sm:$0xff]
    %v504 = vld [vmem:[#allocation2 + $0x48] sm:$0xff]
    %v505 = vld [vmem:[#allocation2 + $0x50] sm:$0xff]
    %v506 = vld [vmem:[#allocation2 + $0x58] sm:$0xff]
    %v507 = vld [vmem:[#allocation2 + $0x60] sm:$0xff]
    %v508 = vld [vmem:[#allocation2 + $0x68] sm:$0xff]
    %v509 = vld [vmem:[#allocation2 + $0x70] sm:$0xff]
    %v510 = vld [vmem:[#allocation2 + $0x78] sm:$0xff]
    %v511 = vmax.f32 %v495, 0.0
    %v512 = vmax.f32 %v496, 0.0
    %v513 = vmax.f32 %v497, 0.0
    %v514 = vmax.f32 %v498, 0.0
    %v515 = vmax.f32 %v499, 0.0
    %v516 = vmax.f32 %v500, 0.0
    %v517 = vmax.f32 %v501, 0.0
    %v518 = vmax.f32 %v502, 0.0
    %v519 = vmax.f32 %v503, 0.0
    %v520 = vmax.f32 %v504, 0.0
    %v521 = vmax.f32 %v505, 0.0
    %v522 = vmax.f32 %v506, 0.0
    %v523 = vmax.f32 %v507, 0.0
    %v524 = vmax.f32 %v508, 0.0
    %v525 = vmax.f32 %v509, 0.0
    %v526 = vmax.f32 %v510, 0.0
    %v527 = vpack.c.bf16 %v512, %v511
    %v528 = vpack.c.bf16 %v514, %v513
    %v529 = vpack.c.bf16 %v516, %v515
    %v530 = vpack.c.bf16 %v518, %v517
    %v531 = vpack.c.bf16 %v520, %v519
    %v532 = vpack.c.bf16 %v522, %v521
    %v533 = vpack.c.bf16 %v524, %v523
    %v534 = vpack.c.bf16 %v526, %v525
    %v543 = vunpack.c.l.b16 %v527
    %v544 = vunpack.c.h.b16 %v527
    %v545 = vunpack.c.l.b16 %v528
    %v546 = vunpack.c.h.b16 %v528
    %v547 = vunpack.c.l.b16 %v529
    %v548 = vunpack.c.h.b16 %v529
    %v549 = vunpack.c.l.b16 %v530
    %v550 = vunpack.c.h.b16 %v530
    %v551 = vunpack.c.l.b16 %v531
    %v552 = vunpack.c.h.b16 %v531
    %v553 = vunpack.c.l.b16 %v532
    %v554 = vunpack.c.h.b16 %v532
    %v555 = vunpack.c.l.b16 %v533
    %v556 = vunpack.c.h.b16 %v533
    %v557 = vunpack.c.l.b16 %v534
    %v558 = vunpack.c.h.b16 %v534
    %v559 = vpack.c.b16 %v543, %v543
    %v560 = vpack.c.b16 %v544, %v544
    %v561 = vpack.c.b16 %v545, %v545
    %v562 = vpack.c.b16 %v546, %v546
    %v563 = vpack.c.b16 %v547, %v547
    %v564 = vpack.c.b16 %v548, %v548
    %v565 = vpack.c.b16 %v549, %v549
    %v566 = vpack.c.b16 %v550, %v550
    %v567 = vpack.c.b16 %v551, %v551
    %v568 = vpack.c.b16 %v552, %v552
    %v569 = vpack.c.b16 %v553, %v553
    %v570 = vpack.c.b16 %v554, %v554
    %v571 = vpack.c.b16 %v555, %v555
    %v572 = vpack.c.b16 %v556, %v556
    %v573 = vpack.c.b16 %v557, %v557
    %v574 = vpack.c.b16 %v558, %v558
    %591 = vst [vmem:[%s4] sm:$0xf] %v559
    %592 = vst [vmem:[%s4 + $0x4] sm:$0xf] %v560
    %593 = vst [vmem:[%s4 + $0x8] sm:$0xf] %v561
    %594 = vst [vmem:[%s4 + $0xc] sm:$0xf] %v562
    %595 = vst [vmem:[%s4 + $0x10] sm:$0xf] %v563
    %596 = vst [vmem:[%s4 + $0x14] sm:$0xf] %v564
    %597 = vst [vmem:[%s4 + $0x18] sm:$0xf] %v565
    %598 = vst [vmem:[%s4 + $0x1c] sm:$0xf] %v566
    %599 = vst [vmem:[%s4 + $0x20] sm:$0xf] %v567
    %600 = vst [vmem:[%s4 + $0x24] sm:$0xf] %v568
    %601 = vst [vmem:[%s4 + $0x28] sm:$0xf] %v569
    %602 = vst [vmem:[%s4 + $0x2c] sm:$0xf] %v570
    %603 = vst [vmem:[%s4 + $0x30] sm:$0xf] %v571
    %604 = vst [vmem:[%s4 + $0x34] sm:$0xf] %v572
    %605 = vst [vmem:[%s4 + $0x38] sm:$0xf] %v573
    %606 = vst [vmem:[%s4 + $0x3c] sm:$0xf] %v574
  $region25: #{gcn_encoder_forward.2} parent=0 // pred_fallthru
    _
  // Predicated region
  $region26: #{gcn_encoder_forward.2} parent=0 // pred_check
    _
  $region27: #{gcn_encoder_forward.2} parent=0 // pred_check_branch
    %608 = sbr.rel (0) target = $region29
  $region28: #{gcn_encoder_forward.2} parent=0 // pred_region
    _
  $region29: #{gcn_encoder_forward.2} parent=0 // pred_fallthru
    _
  // Predicated region
  $region30: #{gcn_encoder_forward.2} parent=0 // pred_check
    _
  $region31: #{gcn_encoder_forward.2} parent=0 // pred_check_branch
    %610 = sbr.rel (0) target = $region33
  $region32: #{gcn_encoder_forward.2} parent=0 // pred_region
    _
  $region33: #{gcn_encoder_forward.2} parent=0 // pred_fallthru
    _

</llo_original>
